<compile_context>
chip_gen: v7x
topology: tpu7x:2x2x1
jax: 0.10.0
libtpu: 0.0.40
codegen_flags: <defaults>
</compile_context>

<pallas_src>
import functools

import jax
import jax.numpy as jnp
from jax import lax
from jax.experimental import pallas as pl
from jax.experimental.pallas import tpu as pltpu


def _round_up(n, m):
    return (n + m - 1) // m * m


def _mlp_kernel(x_ref, p_ref, b3_ref, o_ref, *, d_in, hidden, sub, n_sub):
    """relu(x@W1+b1) -> relu(.@W2+b2) -> VPU dot with fc3 row + b3."""
    # Static, 8-aligned row offsets into the packed parameter block.
    w2_off = _round_up(d_in, 8)
    b_off = w2_off + _round_up(hidden, 8)
    w1 = p_ref[0:d_in, :]                      # (D_in, H)
    w2 = p_ref[w2_off:w2_off + hidden, :]      # (H, H)
    b1 = p_ref[b_off + 0:b_off + 1, :]         # (1, H)
    b2 = p_ref[b_off + 1:b_off + 2, :]         # (1, H)
    w3 = p_ref[b_off + 2:b_off + 3, :]         # (1, H)   fc3 weight as a row
    b3 = b3_ref[0]                             # SMEM scalar

    def chunk(row0):
        x = x_ref[pl.ds(row0, sub), :]                                   # f32
        # fc1 + dropout(eval)=identity + relu.  f32 accumulation on the MXU;
        # at K=N=32 the f32-vs-bf16 MXU cost difference is irrelevant.
        h1 = jnp.dot(x, w1, preferred_element_type=jnp.float32)
        h1 = jnp.maximum(h1 + b1, 0.0)
        # fc2 + identity dropout + relu (h1 kept in f32 -- no bf16 rounding).
        h2 = jnp.dot(h1, w2, preferred_element_type=jnp.float32)
        h2 = jnp.maximum(h2 + b2, 0.0)
        # fc3 has N=1: VPU multiply + XLU lane reduce instead of a nearly
        # empty MXU pass.
        return jnp.sum(h2 * w3, axis=-1) + b3                            # (sub,)

    if n_sub == 1:
        o_ref[0, :] = chunk(0).astype(o_ref.dtype)
    else:
        # Sub-chunk loop bounds f32 intermediate live ranges for large tiles.
        def body(j, carry):
            row0 = pl.multiple_of(j * sub, sub)
            o_ref[j, :] = chunk(row0).astype(o_ref.dtype)
            return carry

        lax.fori_loop(0, n_sub, body, 0)
    # TODO(synk): training-mode dropout (p=0.5) would need pltpu.prng_seed /
    # pltpu.prng_random_bits; forward semantics here follow model.eval().


def _choose_tiling(B):
    """Return (block_b, sub): batch tile per grid step and in-kernel sub-chunk.

    - block_b as large as divides B (up to 2048) to amortize the ~0.35us fixed
      per-grid-step cost (the kernel is x-DMA / step-overhead bound).
    - prefer >=2 grid steps so the x DMA pipelines and both v7x TensorCores
      get work under dimension_semantics=("parallel",).
    - for the big tiles, 8 in-kernel sub-chunks keep the f32 (sub, H)
      intermediates small and the (8, sub) output block aligned to the f32
      (8, 128) tile.
    """
    for block_b, sub in ((2048, 256), (1024, 128)):
        if B % block_b == 0 and B // block_b >= 2:
            return block_b, sub
    for block_b in (512, 256, 128):
        if B % block_b == 0:
            return block_b, block_b
    return B, B          # tiny / irregular batch: one step, full-array blocks


def _pack_params(w1, b1, w2, b2, w3):
    """Pack W1, W2, b1, b2, w3 into one f32 VMEM block (8-aligned segments)."""
    d_in, hidden = w1.shape
    w2_off = _round_up(d_in, 8)
    b_off = w2_off + _round_up(hidden, 8)
    p = jnp.zeros((b_off + 3, hidden), jnp.float32)
    p = p.at[0:d_in, :].set(w1.astype(jnp.float32))
    p = p.at[w2_off:w2_off + hidden, :].set(w2.astype(jnp.float32))
    p = p.at[b_off + 0, :].set(b1.reshape(-1).astype(jnp.float32))
    p = p.at[b_off + 1, :].set(b2.reshape(-1).astype(jnp.float32))
    p = p.at[b_off + 2, :].set(w3.reshape(-1).astype(jnp.float32))
    return p


@jax.jit
def mlp_forward(x, w1, b1, w2, b2, w3, b3):
    B, d_in = x.shape
    hidden = w1.shape[1]
    out_dtype = x.dtype

    block_b, sub = _choose_tiling(B)
    n_sub = block_b // sub
    assert B % block_b == 0 and block_b % sub == 0

    packed = _pack_params(w1, b1, w2, b2, w3)       # tiny (H=32) one-shot op
    b3_s = b3.reshape(-1).astype(jnp.float32)       # (1,) scalar -> SMEM

    kernel = functools.partial(_mlp_kernel, d_in=d_in, hidden=hidden,
                               sub=sub, n_sub=n_sub)

    out2d = pl.pallas_call(
        kernel,
        out_shape=jax.ShapeDtypeStruct((B // sub, sub), out_dtype),
        grid_spec=pltpu.PrefetchScalarGridSpec(
            num_scalar_prefetch=0,
            grid=(B // block_b,),
            in_specs=[
                # x streamed as f32 straight from HBM -- no wrapper cast pass.
                pl.BlockSpec((block_b, d_in), lambda i: (i, 0)),
                # all weights/biases except b3, packed into one resident block
                pl.BlockSpec(packed.shape, lambda i: (0, 0)),
                # fc3 bias scalar
                pl.BlockSpec(memory_space=pltpu.MemorySpace.SMEM),
            ],
            # Lane-dense output rows (sub >= 128 whenever B allows).
            out_specs=pl.BlockSpec((n_sub, sub), lambda i: (i, 0)),
        ),
        compiler_params=pltpu.CompilerParams(
            dimension_semantics=("parallel",),
            # ~4 MiB actually used at block_b=2048; 32 MiB stays within v7x's
            # scoped default (64 MiB physical) and is a no-op on v5e/v6e.
            vmem_limit_bytes=32 * 1024 * 1024,
        ),
    )(x, packed, b3_s)

    return out2d.reshape(B, 1)


def init_params(key, input_size, hidden_size):
    """Deterministic init mirroring nn.Linear default (U[-1/sqrt(fan_in), +])."""
    def linear(k, fan_in, fan_out):
        kw, kb = jax.random.split(k)
        bound = 1.0 / jnp.sqrt(fan_in)
        # stored as [in, out] so the kernel computes x @ W (== x @ W_torch.T)
        w = jax.random.uniform(kw, (fan_in, fan_out), jnp.float32, -bound, bound)
        b = jax.random.uniform(kb, (1, fan_out), jnp.float32, -bound, bound)
        return w, b

    k1, k2, k3 = jax.random.split(key, 3)
    w1, b1 = linear(k1, input_size, hidden_size)
    w2, b2 = linear(k2, hidden_size, hidden_size)
    w3, b3 = linear(k3, hidden_size, 1)
    return w1, b1, w2, b2, w3, b3


if __name__ == "__main__":
    input_size, hidden_size = 32, 32

    key = jax.random.PRNGKey(0)
    kx, kp = jax.random.split(key)
    params = init_params(kp, input_size, hidden_size)
    w1, b1, w2, b2, w3, b3 = params

    def reference(xin):
        # Eval-mode dropout == identity.
        h1 = jnp.maximum(xin @ w1 + b1, 0.0)
        h2 = jnp.maximum(h1 @ w2 + b2, 0.0)
        return h2 @ w3 + b3

    # Exercise all structural paths: single-step full-array block (B=8),
    # multi-step single-chunk tiles (B=1024), and the large-tile 8-sub-chunk
    # fori_loop path (B=2048 -> block_b=1024, sub=128).
    for batch in (8, 1024, 2048):
        xb = jax.random.normal(jax.random.fold_in(kx, batch),
                               (batch, input_size), jnp.float32)
        out = jax.block_until_ready(mlp_forward(xb, *params))
        assert out.shape == (batch, 1)
        ref = reference(xb)
        err = float(jnp.max(jnp.abs(out - ref)))
        assert jnp.allclose(out, ref, atol=5e-2, rtol=5e-2), (batch, err)

    print("KERNEL_OK")
</pallas_src>

<mosaic_0001>
module attributes {stable_mosaic.version = 11 : i64} {
  func.func @_mlp_kernel(%arg0: i32, %arg1: memref<8x32xf32, #tpu.memory_space<vmem>>, %arg2: memref<67x32xf32, #tpu.memory_space<vmem>>, %arg3: memref<1xf32, #tpu.memory_space<smem>>, %arg4: memref<1x8xf32, #tpu.memory_space<vmem>>) attributes {dimension_semantics = [#tpu.dimension_semantics<parallel>], iteration_bounds = array<i64: 1>, scalar_prefetch = 0 : i64, scratch_operands = 0 : i64, tpu.core_type = #tpu.core_type<tc>, window_params = [{transform_indices = @transform_0, window_bounds = array<i64: 8, 32>}, {pipeline_mode = #tpu.pipeline_mode<synchronous>, transform_indices = @transform_1, window_bounds = array<i64: 67, 32>}, {transform_indices = @transform_2, window_bounds = array<i64: 1>}, {transform_indices = @transform_3, window_bounds = array<i64: 1, 8>}]} {
    %c0 = arith.constant 0 : index
    %c0_0 = arith.constant 0 : index
    %0 = vector.load %arg2[%c0, %c0_0] : memref<67x32xf32, #tpu.memory_space<vmem>>, vector<32x32xf32>
    %c32 = arith.constant 32 : index
    %c0_1 = arith.constant 0 : index
    %1 = vector.load %arg2[%c32, %c0_1] : memref<67x32xf32, #tpu.memory_space<vmem>>, vector<32x32xf32>
    %c64 = arith.constant 64 : index
    %c0_2 = arith.constant 0 : index
    %2 = vector.load %arg2[%c64, %c0_2] : memref<67x32xf32, #tpu.memory_space<vmem>>, vector<1x32xf32>
    %c65 = arith.constant 65 : index
    %c0_3 = arith.constant 0 : index
    %3 = vector.load %arg2[%c65, %c0_3] : memref<67x32xf32, #tpu.memory_space<vmem>>, vector<1x32xf32>
    %c66 = arith.constant 66 : index
    %c0_4 = arith.constant 0 : index
    %4 = vector.load %arg2[%c66, %c0_4] : memref<67x32xf32, #tpu.memory_space<vmem>>, vector<1x32xf32>
    %c0_5 = arith.constant 0 : index
    %5 = memref.load %arg3[%c0_5] : memref<1xf32, #tpu.memory_space<smem>>
    %c0_6 = arith.constant 0 : index
    %c0_7 = arith.constant 0 : index
    %6 = vector.load %arg1[%c0_6, %c0_7] : memref<8x32xf32, #tpu.memory_space<vmem>>, vector<8x32xf32>
    %cst = arith.constant dense<0.000000e+00> : vector<8x32xf32>
    %7 = tpu.matmul %6, %0, %cst {dimension_numbers = #tpu.dot_dimension_numbers<[1], [0], [0], [1], [0, 0, 1, 1], [], []>} : vector<8x32xf32>, vector<32x32xf32>, vector<8x32xf32> -> vector<8x32xf32>
    %8 = vector.broadcast %2 : vector<1x32xf32> to vector<8x32xf32>
    %9 = arith.addf %7, %8 : vector<8x32xf32>
    %cst_8 = arith.constant 0.000000e+00 : f32
    %10 = vector.broadcast %cst_8 : f32 to vector<8x32xf32>
    %11 = arith.maximumf %9, %10 : vector<8x32xf32>
    %cst_9 = arith.constant dense<0.000000e+00> : vector<8x32xf32>
    %12 = tpu.matmul %11, %1, %cst_9 {dimension_numbers = #tpu.dot_dimension_numbers<[1], [0], [0], [1], [0, 0, 1, 1], [], []>} : vector<8x32xf32>, vector<32x32xf32>, vector<8x32xf32> -> vector<8x32xf32>
    %13 = vector.broadcast %3 : vector<1x32xf32> to vector<8x32xf32>
    %14 = arith.addf %12, %13 : vector<8x32xf32>
    %cst_10 = arith.constant 0.000000e+00 : f32
    %15 = vector.broadcast %cst_10 : f32 to vector<8x32xf32>
    %16 = arith.maximumf %14, %15 : vector<8x32xf32>
    %17 = vector.broadcast %4 : vector<1x32xf32> to vector<8x32xf32>
    %18 = arith.mulf %16, %17 : vector<8x32xf32>
    %cst_11 = arith.constant dense<0.000000e+00> : vector<8xf32>
    %19 = vector.multi_reduction <add>, %18, %cst_11 [1] : vector<8x32xf32> to vector<8xf32>
    %20 = vector.broadcast %5 : f32 to vector<8xf32>
    %21 = arith.addf %19, %20 : vector<8xf32>
    %c0_12 = arith.constant 0 : index
    %c0_13 = arith.constant 0 : index
    %22 = vector.load %arg4[%c0_12, %c0_13] : memref<1x8xf32, #tpu.memory_space<vmem>>, vector<1x8xf32>
    %23 = vector.shape_cast %22 : vector<1x8xf32> to vector<8xf32>
    %24 = vector.shape_cast %21 : vector<8xf32> to vector<1x8xf32>
    tpu.vector_store %arg4[%c0_12, %c0_13], %24 {strides = array<i32>} : memref<1x8xf32, #tpu.memory_space<vmem>>, vector<1x8xf32>,
    return
  }
  func.func @transform_0(%arg0: i32) -> (i32, i32) {
    %c0_i32 = arith.constant 0 : i32
    %c0_i32_0 = arith.constant 0 : i32
    return %arg0, %c0_i32 : i32, i32
  }
  func.func @transform_1(%arg0: i32) -> (i32, i32) {
    %c0_i32 = arith.constant 0 : i32
    %c0_i32_0 = arith.constant 0 : i32
    %c0_i32_1 = arith.constant 0 : i32
    return %c0_i32, %c0_i32_0 : i32, i32
  }
  func.func @transform_2(%arg0: i32) -> i32 {
    %c0_i32 = arith.constant 0 : i32
    %c0_i32_0 = arith.constant 0 : i32
    return %c0_i32 : i32
  }
  func.func @transform_3(%arg0: i32) -> (i32, i32) {
    %c0_i32 = arith.constant 0 : i32
    %c0_i32_0 = arith.constant 0 : i32
    return %arg0, %c0_i32 : i32, i32
  }
}

</mosaic_0001>

<llo_original>
// kernel: mlp_forward.1
$region0: #{mlp_forward.1}
  #allocation0 [shape = 'u32[]', space=smem, size = 0x4, offset = 0x4, fixed_abs, tag = 'smem constant byte address 0x4 - core index']
  #allocation1 [shape = 'u32[144,128]{1,0:T(1,128)}', space=vmem, size = 0x12000, scoped, tag = 'internal scratch']
  #allocation2 [shape = 'f32[1]{0:T(128)S(6)}', space=smem, size = 0x200, scoped, tag = 'scoped memory for mlp_forward.1']
  %s0 = inlined_call_operand.vmem [shape: f32[8,32], index: 0, kind: input, shape index: {}]
  %s1 = inlined_call_operand.vmem [shape: f32[67,32], index: 1, kind: input, shape index: {}]
  %s2 = inlined_call_operand.<no memory space> [shape: f32[1], index: 2, kind: input, shape index: {}]
  %s3 = inlined_call_operand.hbm [shape: f32[1,8], index: 3, kind: output, shape index: {}]
  %s4 = sld [smem:[#allocation0]]
  $region22: #{mlp_forward.1} parent=0
    _
  %s6 = ssub.s32 1, %s4
  %s7 = scalar_select 0, %s6, %s4
  %8 = sst [smem:[#allocation2]] %s2
  $region1: #{mlp_forward.1} parent=0
    #allocation3 [shape = 'u8[512]{0}', space=vmem, size = 0x400, scoped, tag = 'output window, operand 0, single buffered']
    #allocation4 [shape = 's32[1]{0}', space=sflag, size = 0x4, scoped, tag = 'scoped memory for mlp_forward.1']
    %9 = vsyncpa [#allocation4], 0
    // Predicated region
    $region2: #{mlp_forward.1} parent=1 // pred_check
      _
    $region3: #{mlp_forward.1} parent=1 // pred_check_branch
      %11 = sbr.rel (0) target = $region5
    $region4: #{mlp_forward.1} parent=1 // pred_region
      _
    $region5: #{mlp_forward.1} parent=1 // pred_fallthru
      _
    // Predicated region
    $region6: #{mlp_forward.1} parent=1 // pred_check
      _
    $region7: #{mlp_forward.1} parent=1 // pred_check_branch
      %13 = sbr.rel (0) target = $region9
    $region8: #{mlp_forward.1} parent=1 // pred_region
      _
    $region9: #{mlp_forward.1} parent=1 // pred_fallthru
      _
    // Predicated region
    $region10: #{mlp_forward.1} parent=1 // pred_check
      _
    $region11: #{mlp_forward.1} parent=1 // pred_check_branch
      %15 = sbr.rel (0) target = $region13
    $region12: #{mlp_forward.1} parent=1 // pred_region
      _
    $region13: #{mlp_forward.1} parent=1 // pred_fallthru
      _
    %v16 = vld [vmem:[%s1] sm:$0xff]
    %v17 = vld [vmem:[%s1 + $0x8] sm:$0xff]
    %v18 = vld [vmem:[%s1 + $0x10] sm:$0xff]
    %v19 = vld [vmem:[%s1 + $0x18] sm:$0xff]
    %v20 = vld [vmem:[%s1 + $0x20] sm:$0xff]
    %v21 = vld [vmem:[%s1 + $0x28] sm:$0xff]
    %v22 = vld [vmem:[%s1 + $0x30] sm:$0xff]
    %v23 = vld [vmem:[%s1 + $0x38] sm:$0xff]
    %v24 = vld [vmem:[%s1 + $0x40] sm:$0x1]
    %v25 = vld [vmem:[%s1 + $0x41] sm:$0x1]
    %v26 = vld [vmem:[%s1 + $0x42] sm:$0x1]
    %s27 = sld [smem:[#allocation2]]
    %v28 = vld [vmem:[%s0] sm:$0xff]
    %v29 = vlaneseq
    %v30 = vshrl.u32 %v29, 7
    %v31 = vsub.s32 0, %v30
    %v32 = vrot.slane %v24, %v31
    %vm33 = vcmask 261120
    %v35 = vsel %vm33, %v28, 0
    %37 = vmatprep.subr.mxu0 0.0
    %38 = vmatpush1.msra.mxu0 %v16
    %39 = vmatprep.subr.mxu0 0.0
    %40 = vmatpush1.msra.mxu0 %v17
    %41 = vmatprep.subr.mxu0 0.0
    %42 = vmatpush1.msra.mxu0 %v18
    %43 = vmatprep.subr.mxu0 0.0
    %44 = vmatpush1.msra.mxu0 %v19
    %45 = vmatprep.subr.mxu0 0.0
    %46 = vmatpush1.msra.mxu0 0.0
    %47 = vmatprep.subr.mxu0 0.0
    %48 = vmatpush1.msra.mxu0 0.0
    %49 = vmatprep.subr.mxu0 0.0
    %50 = vmatpush1.msra.mxu0 0.0
    %51 = vmatprep.subr.mxu0 0.0
    %52 = vmatpush1.msra.mxu0 0.0
    %53 = vmatprep.subr.mxu0 0.0
    %54 = vmatpush1.msra.mxu0 0.0
    %55 = vmatprep.subr.mxu0 0.0
    %56 = vmatpush1.msra.mxu0 0.0
    %57 = vmatprep.subr.mxu0 0.0
    %58 = vmatpush1.msra.mxu0 0.0
    %59 = vmatprep.subr.mxu0 0.0
    %60 = vmatpush1.msra.mxu0 0.0
    %61 = vmatprep.subr.mxu0 0.0
    %62 = vmatpush1.msra.mxu0 0.0
    %63 = vmatprep.subr.mxu0 0.0
    %64 = vmatpush1.msra.mxu0 0.0
    %65 = vmatprep.subr.mxu0 0.0
    %66 = vmatpush1.msra.mxu0 0.0
    %67 = vmatprep.subr.mxu0 0.0
    %68 = vmatpush1.msra.mxu0 0.0
    %69 = vmatprep.subr.mxu0 0.0
    %70 = vmatpush1.msra.mxu0 0.0
    %71 = vmatprep.subr.mxu0 0.0
    %72 = vmatpush1.msra.mxu0 0.0
    %73 = vmatprep.subr.mxu0 0.0
    %74 = vmatpush1.msra.mxu0 0.0
    %75 = vmatprep.subr.mxu0 0.0
    %76 = vmatpush1.msra.mxu0 0.0
    %77 = vmatprep.subr.mxu0 0.0
    %78 = vmatpush1.msra.mxu0 0.0
    %79 = vmatprep.subr.mxu0 0.0
    %80 = vmatpush1.msra.mxu0 0.0
    %81 = vmatprep.subr.mxu0 0.0
    %82 = vmatpush1.msra.mxu0 0.0
    %83 = vmatprep.subr.mxu0 0.0
    %84 = vmatpush1.msra.mxu0 0.0
    %85 = vmatprep.subr.mxu0 0.0
    %86 = vmatpush1.msra.mxu0 0.0
    %87 = vmatprep.subr.mxu0 0.0
    %88 = vmatpush1.msra.mxu0 0.0
    %89 = vmatprep.subr.mxu0 0.0
    %90 = vmatpush1.msra.mxu0 0.0
    %91 = vmatprep.subr.mxu0 0.0
    %92 = vmatpush1.msra.mxu0 0.0
    %93 = vmatprep.subr.mxu0 0.0
    %94 = vmatpush1.msra.mxu0 0.0
    %95 = vmatprep.subr.mxu0 0.0
    %96 = vmatpush1.msra.mxu0 0.0
    %97 = vmatprep.subr.mxu0 0.0
    %98 = vmatpush1.msra.mxu0 0.0
    %99 = vmatprep.subr.mxu0 0.0
    %100 = vmatpush1.msra.mxu0 0.0
    %101 = vmatprep.mubr.f32.mxu0 0.0
    %102 = vmatmul.mubr.f32.gmra.mrb[0].mxu0 %v35
    %v103 = vpop.f32.mrb[0].mxu0
    %v104 = vadd.f32 %v32, %v103
    %v105 = vpop.f32.mrb[0].mxu0
    %106 = vdwg.mxu0
    %v107 = vmax.f32 %v104, 0.0
    %v108 = vlaneseq
    %v109 = vshrl.u32 %v108, 7
    %v110 = vsub.s32 0, %v109
    %v111 = vrot.slane %v25, %v110
    %v113 = vsel %vm33, %v107, 0
    %115 = vmatprep.subr.mxu0 0.0
    %116 = vmatpush1.msra.mxu0 %v20
    %117 = vmatprep.subr.mxu0 0.0
    %118 = vmatpush1.msra.mxu0 %v21
    %119 = vmatprep.subr.mxu0 0.0
    %120 = vmatpush1.msra.mxu0 %v22
    %121 = vmatprep.subr.mxu0 0.0
    %122 = vmatpush1.msra.mxu0 %v23
    %123 = vmatprep.subr.mxu0 0.0
    %124 = vmatpush1.msra.mxu0 0.0
    %125 = vmatprep.subr.mxu0 0.0
    %126 = vmatpush1.msra.mxu0 0.0
    %127 = vmatprep.subr.mxu0 0.0
    %128 = vmatpush1.msra.mxu0 0.0
    %129 = vmatprep.subr.mxu0 0.0
    %130 = vmatpush1.msra.mxu0 0.0
    %131 = vmatprep.subr.mxu0 0.0
    %132 = vmatpush1.msra.mxu0 0.0
    %133 = vmatprep.subr.mxu0 0.0
    %134 = vmatpush1.msra.mxu0 0.0
    %135 = vmatprep.subr.mxu0 0.0
    %136 = vmatpush1.msra.mxu0 0.0
    %137 = vmatprep.subr.mxu0 0.0
    %138 = vmatpush1.msra.mxu0 0.0
    %139 = vmatprep.subr.mxu0 0.0
    %140 = vmatpush1.msra.mxu0 0.0
    %141 = vmatprep.subr.mxu0 0.0
    %142 = vmatpush1.msra.mxu0 0.0
    %143 = vmatprep.subr.mxu0 0.0
    %144 = vmatpush1.msra.mxu0 0.0
    %145 = vmatprep.subr.mxu0 0.0
    %146 = vmatpush1.msra.mxu0 0.0
    %147 = vmatprep.subr.mxu0 0.0
    %148 = vmatpush1.msra.mxu0 0.0
    %149 = vmatprep.subr.mxu0 0.0
    %150 = vmatpush1.msra.mxu0 0.0
    %151 = vmatprep.subr.mxu0 0.0
    %152 = vmatpush1.msra.mxu0 0.0
    %153 = vmatprep.subr.mxu0 0.0
    %154 = vmatpush1.msra.mxu0 0.0
    %155 = vmatprep.subr.mxu0 0.0
    %156 = vmatpush1.msra.mxu0 0.0
    %157 = vmatprep.subr.mxu0 0.0
    %158 = vmatpush1.msra.mxu0 0.0
    %159 = vmatprep.subr.mxu0 0.0
    %160 = vmatpush1.msra.mxu0 0.0
    %161 = vmatprep.subr.mxu0 0.0
    %162 = vmatpush1.msra.mxu0 0.0
    %163 = vmatprep.subr.mxu0 0.0
    %164 = vmatpush1.msra.mxu0 0.0
    %165 = vmatprep.subr.mxu0 0.0
    %166 = vmatpush1.msra.mxu0 0.0
    %167 = vmatprep.subr.mxu0 0.0
    %168 = vmatpush1.msra.mxu0 0.0
    %169 = vmatprep.subr.mxu0 0.0
    %170 = vmatpush1.msra.mxu0 0.0
    %171 = vmatprep.subr.mxu0 0.0
    %172 = vmatpush1.msra.mxu0 0.0
    %173 = vmatprep.subr.mxu0 0.0
    %174 = vmatpush1.msra.mxu0 0.0
    %175 = vmatprep.subr.mxu0 0.0
    %176 = vmatpush1.msra.mxu0 0.0
    %177 = vmatprep.subr.mxu0 0.0
    %178 = vmatpush1.msra.mxu0 0.0
    %179 = vmatprep.mubr.f32.mxu0 0.0
    %180 = vmatmul.mubr.f32.gmra.mrb[0].mxu0 %v113
    %v181 = vpop.f32.mrb[0].mxu0
    %v182 = vadd.f32 %v111, %v181
    %v183 = vpop.f32.mrb[0].mxu0
    %184 = vdwg.mxu0
    %v185 = vmax.f32 %v182, 0.0
    %v186 = vlaneseq
    %v187 = vshrl.u32 %v186, 7
    %v188 = vsub.s32 0, %v187
    %v189 = vrot.slane %v26, %v188
    %v190 = vmul.f32 %v185, %v189
    %v191 = vsel %vm33, %v190, 0.0
    %192 = vadd.xlane.f32.xlu0 %v191
    %v193 = vpop.xlane.xlu0 %192
    %v194 = vstv %s27
    %v195 = vadd.f32 %v193, %v194
    %v197 = vlaneseq
    %v198 = vand.u32 %v197, 127
    %v199 = vlaneseq
    %v200 = vshrl.u32 %v199, 7
    %v201 = vsub.s32 %v198, %v200
    %v202 = vrot.slane %v195, %v201
    %vm204 = vcmask 57344
    %205 = vst.msk [vmem:[#allocation3] sm:$0x1] %vm204, %v202
    // Predicated region
    $region14: #{mlp_forward.1} parent=1 // pred_check
      _
    $region15: #{mlp_forward.1} parent=1 // pred_check_branch
      %207 = sbr.rel (0) target = $region17
    $region16: #{mlp_forward.1} parent=1 // pred_region
      %s209 = ssub.s32 16, 16
      %210 = vsyncadd [#allocation4], %s209
      %s212 = sshll.u32 [#allocation3], 4
      %s213 = int_to_ptr.vmem [resolvable:$true] %s212
      %215 = dma.vmem_to_hbm [thread:$0]  %s213, 16, %s3, [#allocation4]
    $region17: #{mlp_forward.1} parent=1 // pred_fallthru
      _
    // Predicated region
    $region18: #{mlp_forward.1} parent=1 // pred_check
      _
    $region19: #{mlp_forward.1} parent=1 // pred_check_branch
      %217 = sbr.rel (0) target = $region21
    $region20: #{mlp_forward.1} parent=1 // pred_region
      %218 = dma.done [#allocation4], 16
    $region21: #{mlp_forward.1} parent=1 // pred_fallthru
      _
    %219 = vsyncpa [#allocation4], 1

</llo_original>
